<compile_context>
chip_gen: v5e
topology: v5e:2x2
jax: 0.10.0
libtpu: 0.0.40
codegen_flags: <defaults>
</compile_context>

<pallas_src>
import math

import jax
import jax.numpy as jnp
from jax.experimental import pallas as pl
from jax.experimental.pallas import tpu as pltpu

EPS = 1e-6
_TRANS_B = (((1,), (1,)), ((), ()))        # dot_general numbers for q @ k.T


def _layer_norm(x):
    # LayerNorm(channels, elementwise_affine=False, eps=1e-6) over last axis.
    mu = jnp.mean(x, axis=-1, keepdims=True)
    xc = x - mu
    var = jnp.mean(xc * xc, axis=-1, keepdims=True)
    return xc * jax.lax.rsqrt(var + EPS)


def _gelu_tanh(x):
    # torch GELU(approximate='tanh')
    c = 0.7978845608028654  # sqrt(2/pi)
    return 0.5 * x * (1.0 + jnp.tanh(c * (x + 0.044715 * x * x * x)))


# --------------------------------------------------------------------------
# Kernel 1: LN1 + fused QKV projection (row-tiled)
# --------------------------------------------------------------------------
def _ln_qkv_kernel(x_ref, w_ref, b_ref, qkv_ref):
    h = _layer_norm(x_ref[0].astype(jnp.float32)).astype(jnp.bfloat16)
    qkv = jnp.dot(h, w_ref[...], preferred_element_type=jnp.float32)
    qkv_ref[0] = (qkv + b_ref[...]).astype(qkv_ref.dtype)


# --------------------------------------------------------------------------
# Kernel 2: flash attention (heads on the grid, online softmax over KV tiles)
# --------------------------------------------------------------------------
def _flash_attn_kernel(q_ref, k_ref, v_ref, o_ref, m_sc, l_sc, acc_sc):
    kv = pl.program_id(3)

    @pl.when(kv == 0)
    def _():
        m_sc[...] = jnp.full_like(m_sc, -jnp.inf)
        l_sc[...] = jnp.zeros_like(l_sc)
        acc_sc[...] = jnp.zeros_like(acc_sc)

    q = q_ref[0, 0]                                   # (Tq, d) bf16, pre-scaled
    k = k_ref[0, 0]                                   # (Tk, d) bf16
    v = v_ref[0, 0]                                   # (Tk, d) bf16

    s = jax.lax.dot_general(q, k, _TRANS_B,
                            preferred_element_type=jnp.float32)   # (Tq, Tk)

    m_prev = m_sc[...]
    m_new = jnp.maximum(m_prev, jnp.max(s, axis=-1, keepdims=True))
    alpha = jnp.exp(m_prev - m_new)
    p = jnp.exp(s - m_new)
    l_sc[...] = alpha * l_sc[...] + jnp.sum(p, axis=-1, keepdims=True)
    acc_sc[...] = alpha * acc_sc[...] + jnp.dot(
        p.astype(v.dtype), v, preferred_element_type=jnp.float32)
    m_sc[...] = m_new

    @pl.when(kv == pl.num_programs(3) - 1)
    def _():
        inv_l = pl.reciprocal(l_sc[...], approx=True)
        o_ref[0, 0] = (acc_sc[...] * inv_l).astype(o_ref.dtype)


# --------------------------------------------------------------------------
# Kernel 3: out-projection + residual + LN2 + MLP + residual (row-tiled)
# --------------------------------------------------------------------------
def _out_mlp_kernel(x_ref, a_ref, wo_ref, bo_ref, w1_ref, b1_ref,
                    w2_ref, b2_ref, o_ref):
    x = x_ref[0].astype(jnp.float32)                          # (Tr, C)
    a = a_ref[0]                                              # (Tr, C) bf16
    y = x + jnp.dot(a, wo_ref[...],
                    preferred_element_type=jnp.float32) + bo_ref[...]
    h = _layer_norm(y).astype(jnp.bfloat16)
    h1 = jnp.dot(h, w1_ref[...],
                 preferred_element_type=jnp.float32) + b1_ref[...]
    h1 = _gelu_tanh(h1).astype(jnp.bfloat16)
    o_ref[0] = (y + jnp.dot(h1, w2_ref[...],
                            preferred_element_type=jnp.float32)
                + b2_ref[...]).astype(o_ref.dtype)


# --------------------------------------------------------------------------
# Wrapper
# --------------------------------------------------------------------------
def _row_tile(n, target):
    """Largest divisor of n that is <= target and a multiple of 8 (or n)."""
    if n <= target:
        return n
    t = target - target % 8
    while t >= 8:
        if n % t == 0:
            return t
        t -= 8
    return n


def _const_spec(arr):
    shape = arr.shape
    return pl.BlockSpec(shape, lambda *_: (0,) * len(shape))


def sparse_transformer_block(x, params, num_heads, *,
                             row_tile=256, q_tile=256, kv_tile=256):
    """Forward pass of SparseTransformerBlock.

    x: (B, N, C) float32 — dense view of the jagged tensor with equal-length
       batches. params: (wqkv, bqkv, wout, bout, w1, b1, w2, b2) float32.
    """
    B, N, C = x.shape
    assert C % num_heads == 0, "channels must be divisible by num_heads"
    H = num_heads
    d = C // H
    # NOTE: for real configs keep C a multiple of 128 and head_dim >= 64
    # (ideally 128) so per-head tiles are lane-dense; smaller demo shapes are
    # still correct, just under-utilized.

    wqkv, bqkv, wout, bout, w1, b1, w2, b2 = params

    # Fold the 1/sqrt(d) softmax scale into the q columns of Wqkv / bqkv at
    # trace time (zero in-kernel cost), then cast weights to bf16 for the MXU.
    scale = 1.0 / math.sqrt(d)
    col_scale = jnp.concatenate(
        [jnp.full((C,), scale, jnp.float32), jnp.ones((2 * C,), jnp.float32)])
    wqkv_b = (wqkv * col_scale).astype(jnp.bfloat16)
    bqkv_s = bqkv * col_scale                      # biases stay f32
    wout_b = wout.astype(jnp.bfloat16)
    w1_b = w1.astype(jnp.bfloat16)
    w2_b = w2.astype(jnp.bfloat16)

    tr = _row_tile(N, row_tile)
    tq = _row_tile(N, q_tile)
    tk = _row_tile(N, kv_tile)

    # ---- 1) LN1 + fused QKV projection, tiled over rows --------------------
    qkv = pl.pallas_call(
        _ln_qkv_kernel,
        out_shape=jax.ShapeDtypeStruct((B, N, 3 * C), jnp.bfloat16),
        grid_spec=pltpu.PrefetchScalarGridSpec(
            num_scalar_prefetch=0,
            grid=(B, N // tr),
            in_specs=[
                pl.BlockSpec((1, tr, C), lambda b, i: (b, i, 0)),
                _const_spec(wqkv_b),
                _const_spec(bqkv_s),
            ],
            out_specs=pl.BlockSpec((1, tr, 3 * C), lambda b, i: (b, i, 0)),
        ),
        compiler_params=pltpu.CompilerParams(
            dimension_semantics=("parallel", "parallel")),
    )(x, wqkv_b, bqkv_s)

    # Wrapper-side layout plumbing: (B, N, 3C) -> (B, 3H, N, d), a single
    # transpose.  q head h = block h, k head h = block H+h, v head h = 2H+h;
    # the flash-attention BlockSpecs index those blocks directly, so no
    # separate q/k/v slice copies are materialized.
    qkv3 = qkv.reshape(B, N, 3 * H, d).transpose(0, 2, 1, 3)

    # ---- 2) Flash attention: heads on the grid, online softmax over KV -----
    attn = pl.pallas_call(
        _flash_attn_kernel,
        out_shape=jax.ShapeDtypeStruct((B, H, N, d), jnp.bfloat16),
        grid_spec=pltpu.PrefetchScalarGridSpec(
            num_scalar_prefetch=0,
            grid=(B, H, N // tq, N // tk),
            in_specs=[
                pl.BlockSpec((1, 1, tq, d),
                             lambda b, h, i, j: (b, h, i, 0)),          # q
                pl.BlockSpec((1, 1, tk, d),
                             lambda b, h, i, j: (b, H + h, j, 0)),      # k
                pl.BlockSpec((1, 1, tk, d),
                             lambda b, h, i, j: (b, 2 * H + h, j, 0)),  # v
            ],
            out_specs=pl.BlockSpec((1, 1, tq, d),
                                   lambda b, h, i, j: (b, h, i, 0)),
            scratch_shapes=[
                pltpu.VMEM((tq, 1), jnp.float32),   # running max
                pltpu.VMEM((tq, 1), jnp.float32),   # running denom
                pltpu.VMEM((tq, d), jnp.float32),   # output accumulator
            ],
        ),
        compiler_params=pltpu.CompilerParams(
            dimension_semantics=("parallel", "parallel", "parallel",
                                 "arbitrary")),
    )(qkv3, qkv3, qkv3)

    attn = attn.transpose(0, 2, 1, 3).reshape(B, N, C)   # back to (B, N, C)

    # ---- 3) out-proj + residual + LN2 + MLP + residual, tiled over rows ----
    # TODO(synk): for very large C, stream Wqkv/W1/W2 from HBM in K-chunks
    # (pl.Buffered / pltpu.emit_pipeline) and raise vmem_limit_bytes; at these
    # sizes the bf16 weight blocks fit comfortably in default scoped VMEM.
    out = pl.pallas_call(
        _out_mlp_kernel,
        out_shape=jax.ShapeDtypeStruct((B, N, C), x.dtype),
        grid_spec=pltpu.PrefetchScalarGridSpec(
            num_scalar_prefetch=0,
            grid=(B, N // tr),
            in_specs=[
                pl.BlockSpec((1, tr, C), lambda b, i: (b, i, 0)),  # x (resid)
                pl.BlockSpec((1, tr, C), lambda b, i: (b, i, 0)),  # attn
                _const_spec(wout_b),
                _const_spec(bout),
                _const_spec(w1_b),
                _const_spec(b1),
                _const_spec(w2_b),
                _const_spec(b2),
            ],
            out_specs=pl.BlockSpec((1, tr, C), lambda b, i: (b, i, 0)),
        ),
        compiler_params=pltpu.CompilerParams(
            dimension_semantics=("parallel", "parallel")),
    )(x, attn, wout_b, bout, w1_b, b1, w2_b, b2)

    return out


# --------------------------------------------------------------------------
# Pure-JAX f32 reference of SparseTransformerBlock._forward (verification)
# --------------------------------------------------------------------------
def reference_block(x, params, num_heads):
    wqkv, bqkv, wout, bout, w1, b1, w2, b2 = params
    B, N, C = x.shape
    d = C // num_heads

    h = _layer_norm(x)
    qkv = h @ wqkv + bqkv
    q, k, v = jnp.split(qkv, 3, axis=-1)
    q = q.reshape(B, N, num_heads, d).transpose(0, 2, 1, 3)
    k = k.reshape(B, N, num_heads, d).transpose(0, 2, 1, 3)
    v = v.reshape(B, N, num_heads, d).transpose(0, 2, 1, 3)
    s = jnp.einsum("bhnd,bhmd->bhnm", q, k) / math.sqrt(d)
    p = jax.nn.softmax(s, axis=-1)
    attn = jnp.einsum("bhnm,bhmd->bhnd", p, v)
    attn = attn.transpose(0, 2, 1, 3).reshape(B, N, C)
    x = x + attn @ wout + bout

    h = _layer_norm(x)
    h = _gelu_tanh(h @ w1 + b1)
    return x + h @ w2 + b2


def init_params(key, channels, mlp_ratio=4.0):
    hidden = int(channels * mlp_ratio)
    ks = jax.random.split(key, 8)
    sc = 0.05
    wqkv = sc * jax.random.normal(ks[0], (channels, 3 * channels), jnp.float32)
    bqkv = sc * jax.random.normal(ks[1], (1, 3 * channels), jnp.float32)
    wout = sc * jax.random.normal(ks[2], (channels, channels), jnp.float32)
    bout = sc * jax.random.normal(ks[3], (1, channels), jnp.float32)
    w1 = sc * jax.random.normal(ks[4], (channels, hidden), jnp.float32)
    b1 = sc * jax.random.normal(ks[5], (1, hidden), jnp.float32)
    w2 = sc * jax.random.normal(ks[6], (hidden, channels), jnp.float32)
    b2 = sc * jax.random.normal(ks[7], (1, channels), jnp.float32)
    return (wqkv, bqkv, wout, bout, w1, b1, w2, b2)


if __name__ == "__main__":
    B, N, C = 2, 64, 64           # 2 grids, 64 voxels each, 64 channels
    NUM_HEADS = 4                 # head_dim = 16
    key = jax.random.PRNGKey(0)
    kx, kp = jax.random.split(key)

    x = jax.random.normal(kx, (B, N, C), jnp.float32)
    params = init_params(kp, C, mlp_ratio=4.0)

    # Small tiles so the demo actually exercises the row / query / kv tiling
    # and the online-softmax accumulation path (4 q-tiles x 4 kv-tiles).
    out = sparse_transformer_block(x, params, NUM_HEADS,
                                   row_tile=16, q_tile=16, kv_tile=16)
    out = jax.block_until_ready(out)

    ref = reference_block(x, params, NUM_HEADS)
    assert out.shape == (B, N, C)
    err = float(jnp.max(jnp.abs(out - ref)))
    assert err < 3e-2, f"max abs error vs f32 reference: {err}"  # bf16 matmuls

    # TODO(synk): ragged per-batch voxel counts (jagged joffsets) would need
    # scalar-prefetched offsets + key masking; equal-length batches used here.
    print("KERNEL_OK")
</pallas_src>

<mosaic_0001>
module attributes {stable_mosaic.version = 11 : i64} {
  func.func @_ln_qkv_kernel(%arg0: i32, %arg1: i32, %arg2: memref<1x16x64xf32, #tpu.memory_space<vmem>>, %arg3: memref<64x192xbf16, #tpu.memory_space<vmem>>, %arg4: memref<1x192xf32, #tpu.memory_space<vmem>>, %arg5: memref<1x16x192xbf16, #tpu.memory_space<vmem>>) attributes {dimension_semantics = [#tpu.dimension_semantics<parallel>, #tpu.dimension_semantics<parallel>], iteration_bounds = array<i64: 2, 4>, scalar_prefetch = 0 : i64, scratch_operands = 0 : i64, tpu.core_type = #tpu.core_type<tc>, window_params = [{transform_indices = @transform_0, window_bounds = array<i64: 1, 16, 64>}, {pipeline_mode = #tpu.pipeline_mode<synchronous>, transform_indices = @transform_1, window_bounds = array<i64: 64, 192>}, {pipeline_mode = #tpu.pipeline_mode<synchronous>, transform_indices = @transform_2, window_bounds = array<i64: 1, 192>}, {transform_indices = @transform_3, window_bounds = array<i64: 1, 16, 192>}]} {
    %c0 = arith.constant 0 : index
    %c0_0 = arith.constant 0 : index
    %c0_1 = arith.constant 0 : index
    %0 = vector.load %arg2[%c0, %c0_0, %c0_1] : memref<1x16x64xf32, #tpu.memory_space<vmem>>, vector<1x16x64xf32>
    %1 = vector.shape_cast %0 : vector<1x16x64xf32> to vector<16x64xf32>
    %cst = arith.constant dense<0.000000e+00> : vector<16xf32>
    %2 = vector.multi_reduction <add>, %1, %cst [1] : vector<16x64xf32> to vector<16xf32>
    %3 = vector.shape_cast %2 : vector<16xf32> to vector<16x1xf32>
    %cst_2 = arith.constant 6.400000e+01 : f32
    %4 = vector.broadcast %cst_2 : f32 to vector<16x1xf32>
    %5 = arith.divf %3, %4 : vector<16x1xf32>
    %6 = vector.broadcast %5 : vector<16x1xf32> to vector<16x64xf32>
    %7 = arith.subf %1, %6 : vector<16x64xf32>
    %8 = arith.mulf %7, %7 : vector<16x64xf32>
    %cst_3 = arith.constant dense<0.000000e+00> : vector<16xf32>
    %9 = vector.multi_reduction <add>, %8, %cst_3 [1] : vector<16x64xf32> to vector<16xf32>
    %10 = vector.shape_cast %9 : vector<16xf32> to vector<16x1xf32>
    %cst_4 = arith.constant 6.400000e+01 : f32
    %11 = vector.broadcast %cst_4 : f32 to vector<16x1xf32>
    %12 = arith.divf %10, %11 : vector<16x1xf32>
    %cst_5 = arith.constant 9.99999997E-7 : f32
    %13 = vector.broadcast %cst_5 : f32 to vector<16x1xf32>
    %14 = arith.addf %12, %13 : vector<16x1xf32>
    %15 = math.rsqrt %14 : vector<16x1xf32>
    %16 = vector.broadcast %15 : vector<16x1xf32> to vector<16x64xf32>
    %17 = arith.mulf %7, %16 : vector<16x64xf32>
    %18 = arith.truncf %17 : vector<16x64xf32> to vector<16x64xbf16>
    %c0_6 = arith.constant 0 : index
    %c0_7 = arith.constant 0 : index
    %19 = vector.load %arg3[%c0_6, %c0_7] : memref<64x192xbf16, #tpu.memory_space<vmem>>, vector<64x192xbf16>
    %cst_8 = arith.constant dense<0.000000e+00> : vector<16x192xf32>
    %20 = tpu.matmul %18, %19, %cst_8 {dimension_numbers = #tpu.dot_dimension_numbers<[1], [0], [0], [1], [0, 0, 1, 1], [], []>} : vector<16x64xbf16>, vector<64x192xbf16>, vector<16x192xf32> -> vector<16x192xf32>
    %c0_9 = arith.constant 0 : index
    %c0_10 = arith.constant 0 : index
    %21 = vector.load %arg4[%c0_9, %c0_10] : memref<1x192xf32, #tpu.memory_space<vmem>>, vector<1x192xf32>
    %22 = vector.broadcast %21 : vector<1x192xf32> to vector<16x192xf32>
    %23 = arith.addf %20, %22 : vector<16x192xf32>
    %24 = arith.truncf %23 : vector<16x192xf32> to vector<16x192xbf16>
    %c0_11 = arith.constant 0 : index
    %c0_12 = arith.constant 0 : index
    %c0_13 = arith.constant 0 : index
    %25 = vector.load %arg5[%c0_11, %c0_12, %c0_13] : memref<1x16x192xbf16, #tpu.memory_space<vmem>>, vector<1x16x192xbf16>
    %26 = vector.shape_cast %25 : vector<1x16x192xbf16> to vector<16x192xbf16>
    %27 = vector.shape_cast %24 : vector<16x192xbf16> to vector<1x16x192xbf16>
    tpu.vector_store %arg5[%c0_11, %c0_12, %c0_13], %27 {strides = array<i32>} : memref<1x16x192xbf16, #tpu.memory_space<vmem>>, vector<1x16x192xbf16>,
    return
  }
  func.func @transform_0(%arg0: i32, %arg1: i32) -> (i32, i32, i32) {
    %c0_i32 = arith.constant 0 : i32
    %c0_i32_0 = arith.constant 0 : i32
    return %arg0, %arg1, %c0_i32 : i32, i32, i32
  }
  func.func @transform_1(%arg0: i32, %arg1: i32) -> (i32, i32) {
    %c0_i32 = arith.constant 0 : i32
    %c0_i32_0 = arith.constant 0 : i32
    %c0_i32_1 = arith.constant 0 : i32
    return %c0_i32, %c0_i32_0 : i32, i32
  }
  func.func @transform_2(%arg0: i32, %arg1: i32) -> (i32, i32) {
    %c0_i32 = arith.constant 0 : i32
    %c0_i32_0 = arith.constant 0 : i32
    %c0_i32_1 = arith.constant 0 : i32
    return %c0_i32, %c0_i32_0 : i32, i32
  }
  func.func @transform_3(%arg0: i32, %arg1: i32) -> (i32, i32, i32) {
    %c0_i32 = arith.constant 0 : i32
    %c0_i32_0 = arith.constant 0 : i32
    return %arg0, %arg1, %c0_i32 : i32, i32, i32
  }
}

</mosaic_0001>

<llo_original>
// kernel: tpu_custom_call.1
$region0: #{tpu_custom_call.1}
  #allocation0 [shape = 'u32[]', space=smem, size = 0x4, offset = 0x4, fixed_abs, tag = 'smem constant byte address 0x4 - core index']
  #allocation1 [shape = 'u32[72,128]{1,0:T(1,128)}', space=vmem, size = 0x9000, scoped, tag = 'internal scratch']
  %s0 = inlined_call_operand.hbm [shape: f32[2,64,64], index: 0, kind: input, shape index: {}]
  %s1 = inlined_call_operand.hbm [shape: bf16[64,192], index: 1, kind: input, shape index: {}]
  %s2 = inlined_call_operand.hbm [shape: f32[1,192], index: 2, kind: input, shape index: {}]
  %s3 = inlined_call_operand.hbm [shape: bf16[2,64,192], index: 3, kind: output, shape index: {}]
  %s4 = sld [smem:[#allocation0]]
  $region57: #{tpu_custom_call.1} parent=0
    _
  %s6 = ssub.s32 1, %s4
  %s7 = scalar_select 0, %s6, %s4
  $region1: #{tpu_custom_call.1} parent=0
    #allocation2 [shape = 'u8[16384]{0}', space=vmem, size = 0x4000, scoped, tag = 'input window, operand 0']
    #allocation3 [shape = 's32[2]{0}', space=sflag, size = 0x8, scoped, tag = 'scoped memory for tpu_custom_call.1']
    #allocation4 [shape = 's32[2]{0}', space=sflag, size = 0x8, scoped, tag = 'scoped memory for tpu_custom_call.1']
    #allocation5 [shape = 'u8[32768]{0}', space=vmem, size = 0x8000, scoped, tag = 'input window, operand 1, single buffered']
    #allocation6 [shape = 's32[1]{0}', space=sflag, size = 0x4, scoped, tag = 'scoped memory for tpu_custom_call.1']
    #allocation7 [shape = 'u8[1024]{0}', space=vmem, size = 0x400, scoped, tag = 'input window, operand 2, single buffered']
    #allocation8 [shape = 'u8[16384]{0}', space=vmem, size = 0x4000, scoped, tag = 'output window, operand 0']
    %8 = vsyncpa [#allocation3], 0
    %s9 = scalar_lea.sflag [#allocation3], 1
    %10 = vsyncpa %s9, 0
    %11 = vsyncpa [#allocation6], 0
    %12 = vsyncpa [#allocation4], 0
    %s13 = scalar_lea.sflag [#allocation4], 1
    %14 = vsyncpa %s13, 0
    loop: start=0, step=1, limit=10
    $region2: #{tpu_custom_call.1} parent=1 // loop_pre_header
      _
    $region3: #{tpu_custom_call.1} parent=1 // loop_header
      %s16 = sphi 0, %s20
      %p17 = scmp.ge.s32.totalorder %s16, 10
      %s23 = sphi 0, %s35
      %s24 = sphi 0, %s31
      %s25 = sphi 0, %s23
      %s26 = sphi 0, %s24
      %s27 = sphi 0, %s25
      %s28 = sphi 0, %s26
      %s40 = sphi 0, %s42
      %s43 = sphi 0, %s40
      %s44 = sphi 0, %s43
      %s60 = sphi 0, %s44
      %s64 = sphi 0, %s64
      %s66 = sphi 0, %s64
      %s67 = sphi 0, %s66
      %s81 = sphi 0, %s67
      %s85 = sphi 0, %s85
      %s87 = sphi 0, %s85
      %s88 = sphi 0, %s87
      %s102 = sphi 0, %s88
      %s110 = sphi 0, %s112
      %s113 = sphi 0, %s110
      %s114 = sphi 0, %s113
      %s130 = sphi 0, %s114
    $region4: #{tpu_custom_call.1} parent=1 // loop_header_branch
      %19 = sbr.rel (%p17) target = $region8
    $region5: #{tpu_custom_call.1} parent=1 // loop_body
      %s21 = ssub.s32 %s16, 1
      %s22 = ssub.s32 %s16, 2
      %s29 = sadd.s32 1, %s24
      %p30 = scmp.ge.s32.totalorder %s29, 4
      %s31 = scalar_select %p30, 0, %s29
      %s32 = sadd.s32 1, %s23
      %s33 = scalar_select %p30, %s32, %s23
      %p34 = scmp.ge.s32.totalorder %s33, 2
      %s35 = scalar_select %p34, 0, %s33
      %s36 = ssub.s32 %s23, %s35
      %s37 = ssub.s32 %s24, %s31
      %s38 = sor.u32 %s36, %s37
      %p39 = scmp.eq.s32.totalorder %s38, 0
      %s41 = sadd.s32 %s40, 1
      %s42 = scalar_select %p39, %s40, %s41
      %p45 = pneg %p39
      %p46 = scmp.eq.s32.totalorder %s16, 7
      %p47 = por %p45, %p46
      %p48 = scmp.ne.s32.totalorder %s40, %s43
      %p49 = scmp.eq.s32.totalorder %s16, 0
      %p50 = por %p48, %p49
      %p51 = scmp.ne.s32.totalorder %s40, %s43
      %p52 = scmp.eq.s32.totalorder %s21, 7
      %p53 = por %p51, %p52
      %p54 = scmp.ne.s32.totalorder %s43, %s44
      %p55 = scmp.eq.s32.totalorder %s21, 0
      %p56 = por %p54, %p55
      %p57 = scmp.ne.s32.totalorder %s43, %s44
      %p58 = scmp.eq.s32.totalorder %s22, 7
      %p59 = por %p57, %p58
      %p61 = scmp.ne.s32.totalorder %s44, %s60
      %p62 = scmp.eq.s32.totalorder %s22, 0
      %p63 = por %p61, %p62
      %s65 = sadd.s32 %s64, 1
      %p68 = scmp.eq.s32.totalorder %s16, 7
      %p69 = scmp.ne.s32.totalorder %s64, %s66
      %p70 = scmp.eq.s32.totalorder %s16, 0
      %p71 = por %p69, %p70
      %p72 = scmp.ne.s32.totalorder %s64, %s66
      %p73 = scmp.eq.s32.totalorder %s21, 7
      %p74 = por %p72, %p73
      %p75 = scmp.ne.s32.totalorder %s66, %s67
      %p76 = scmp.eq.s32.totalorder %s21, 0
      %p77 = por %p75, %p76
      %p78 = scmp.ne.s32.totalorder %s66, %s67
      %p79 = scmp.eq.s32.totalorder %s22, 7
      %p80 = por %p78, %p79
      %p82 = scmp.ne.s32.totalorder %s67, %s81
      %p83 = scmp.eq.s32.totalorder %s22, 0
      %p84 = por %p82, %p83
      %s86 = sadd.s32 %s85, 1
      %p89 = scmp.eq.s32.totalorder %s16, 7
      %p90 = scmp.ne.s32.totalorder %s85, %s87
      %p91 = scmp.eq.s32.totalorder %s16, 0
      %p92 = por %p90, %p91
      %p93 = scmp.ne.s32.totalorder %s85, %s87
      %p94 = scmp.eq.s32.totalorder %s21, 7
      %p95 = por %p93, %p94
      %p96 = scmp.ne.s32.totalorder %s87, %s88
      %p97 = scmp.eq.s32.totalorder %s21, 0
      %p98 = por %p96, %p97
      %p99 = scmp.ne.s32.totalorder %s87, %s88
      %p100 = scmp.eq.s32.totalorder %s22, 7
      %p101 = por %p99, %p100
      %p103 = scmp.ne.s32.totalorder %s88, %s102
      %p104 = scmp.eq.s32.totalorder %s22, 0
      %p105 = por %p103, %p104
      %s106 = ssub.s32 %s23, %s35
      %s107 = ssub.s32 %s24, %s31
      %s108 = sor.u32 %s106, %s107
      %p109 = scmp.eq.s32.totalorder %s108, 0
      %s111 = sadd.s32 %s110, 1
      %s112 = scalar_select %p109, %s110, %s111
      %p115 = pneg %p109
      %p116 = scmp.eq.s32.totalorder %s16, 7
      %p117 = por %p115, %p116
      %p118 = scmp.ne.s32.totalorder %s110, %s113
      %p119 = scmp.eq.s32.totalorder %s16, 0
      %p120 = por %p118, %p119
      %p121 = scmp.ne.s32.totalorder %s110, %s113
      %p122 = scmp.eq.s32.totalorder %s21, 7
      %p123 = por %p121, %p122
      %p124 = scmp.ne.s32.totalorder %s113, %s114
      %p125 = scmp.eq.s32.totalorder %s21, 0
      %p126 = por %p124, %p125
      %p127 = scmp.ne.s32.totalorder %s113, %s114
      %p128 = scmp.eq.s32.totalorder %s22, 7
      %p129 = por %p127, %p128
      %p131 = scmp.ne.s32.totalorder %s114, %s130
      %p132 = scmp.eq.s32.totalorder %s22, 0
      %p133 = por %p131, %p132
      %p134 = scmp.le.s32.totalorder 1, %s16
      %p135 = scmp.lt.s32.totalorder %s16, 9
      %p136 = pnand %p134, %p135
      %p137 = pneg %p136
      // Predicated region
      $region9: #{tpu_custom_call.1} parent=5 // pred_check
        _
      $region10: #{tpu_custom_call.1} parent=5 // pred_check_branch
        %139 = sbr.rel (%p136) target = $region12
      $region11: #{tpu_custom_call.1} parent=5 // pred_region
        %s140 = ssub.s32 %s16, 1
        // Predicated region
        $region13: #{tpu_custom_call.1} parent=11 // pred_check
          %p141 = pneg %p77
        $region14: #{tpu_custom_call.1} parent=11 // pred_check_branch
          %143 = sbr.rel (%p141) target = $region16
        $region15: #{tpu_custom_call.1} parent=11 // pred_region
          %145 = vsyncadd [#allocation6], 0
          %s146 = sshll.u32 %s1, 4
          %s147 = int_to_ptr.hbm [resolvable:$true] %s146
          %s148 = sshll.u32 [#allocation5], 4
          %s149 = int_to_ptr.vmem [resolvable:$true] %s148
          %154 = dma.hbm_to_vmem [thread:$0]  %s147, 1024, %s149, [#allocation6], 128, 128, 8
        $region16: #{tpu_custom_call.1} parent=11 // pred_fallthru
          _
        // Predicated region
        $region17: #{tpu_custom_call.1} parent=11 // pred_check
          %p155 = pneg %p98
        $region18: #{tpu_custom_call.1} parent=11 // pred_check_branch
          %157 = sbr.rel (%p155) target = $region20
        $region19: #{tpu_custom_call.1} parent=11 // pred_region
          %159 = vsyncadd [#allocation6], 0
          %s161 = sshll.u32 %s2, 4
          %s162 = int_to_ptr.hbm [resolvable:$true] %s161
          %s163 = sshll.u32 [#allocation7], 4
          %s164 = int_to_ptr.vmem [resolvable:$true] %s163
          %166 = dma.hbm_to_vmem [thread:$0]  %s162, 32, %s164, [#allocation6]
        $region20: #{tpu_custom_call.1} parent=11 // pred_fallthru
          _
      $region12: #{tpu_custom_call.1} parent=5 // pred_fallthru
        _
      %p167 = scmp.lt.s32.totalorder %s16, 8
      // Predicated region
      $region21: #{tpu_custom_call.1} parent=5 // pred_check
        %p168 = pneg %p167
      $region22: #{tpu_custom_call.1} parent=5 // pred_check_branch
        %170 = sbr.rel (%p168) target = $region24
      $region23: #{tpu_custom_call.1} parent=5 // pred_region
        // Predicated region
        $region25: #{tpu_custom_call.1} parent=23 // pred_check
          %p171 = pneg %p50
        $region26: #{tpu_custom_call.1} parent=23 // pred_check_branch
          %173 = sbr.rel (%p171) target = $region28
        $region27: #{tpu_custom_call.1} parent=23 // pred_region
          %s174 = sand.u32 %s40, 1
          %s175 = scalar_lea.sflag [#allocation3], %s174
          %s176 = sand.u32 %s40, 1
          %s177 = smul.addr %s176, 16
          %s178 = scalar_lea.vmem [#allocation2], %s177
          %s179 = smul.u32 2, %s24
          %181 = vsyncadd %s175, 0
          %s182 = smul.addr %s23, 8
          %s183 = sadd.s32 %s179, %s182
          %s184 = smul.addr %s183, 8
          %s185 = scalar_lea.hbm %s0, %s184
          %s186 = sshll.u32 %s185, 4
          %s187 = int_to_ptr.hbm [resolvable:$true] %s186
          %s188 = sshll.u32 %s178, 4
          %s189 = int_to_ptr.vmem [resolvable:$true] %s188
          %194 = dma.hbm_to_vmem [thread:$0]  %s187, 256, %s189, %s175, 128, 128, 8
        $region28: #{tpu_custom_call.1} parent=23 // pred_fallthru
          _
      $region24: #{tpu_custom_call.1} parent=5 // pred_fallthru
        _
      %p195 = scmp.le.s32.totalorder 1, %s16
      %p196 = scmp.lt.s32.totalorder %s16, 9
      %p197 = pnand %p195, %p196
      %p198 = pneg %p197
      // Predicated region
      $region29: #{tpu_custom_call.1} parent=5 // pred_check
        _
      $region30: #{tpu_custom_call.1} parent=5 // pred_check_branch
        %200 = sbr.rel (%p197) target = $region32
      $region31: #{tpu_custom_call.1} parent=5 // pred_region
        %s201 = ssub.s32 %s16, 1
        %s202 = sand.u32 %s43, 1
        %s203 = scalar_lea.sflag [#allocation3], %s202
        %s204 = sand.u32 %s43, 1
        %s205 = smul.addr %s204, 16
        %s206 = scalar_lea.vmem [#allocation2], %s205
        // Predicated region
        $region33: #{tpu_custom_call.1} parent=31 // pred_check
          %p207 = pneg %p56
        $region34: #{tpu_custom_call.1} parent=31 // pred_check_branch
          %209 = sbr.rel (%p207) target = $region36
        $region35: #{tpu_custom_call.1} parent=31 // pred_region
          %211 = dma.done %s203, 256
        $region36: #{tpu_custom_call.1} parent=31 // pred_fallthru
          _
        // Predicated region
        $region37: #{tpu_custom_call.1} parent=31 // pred_check
          %p212 = pneg %p77
        $region38: #{tpu_custom_call.1} parent=31 // pred_check_branch
          %214 = sbr.rel (%p212) target = $region40
        $region39: #{tpu_custom_call.1} parent=31 // pred_region
          %216 = dma.done [#allocation6], 1024
        $region40: #{tpu_custom_call.1} parent=31 // pred_fallthru
          _
        // Predicated region
        $region41: #{tpu_custom_call.1} parent=31 // pred_check
          %p217 = pneg %p98
        $region42: #{tpu_custom_call.1} parent=31 // pred_check_branch
          %219 = sbr.rel (%p217) target = $region44
        $region43: #{tpu_custom_call.1} parent=31 // pred_region
          %221 = dma.done [#allocation6], 32
        $region44: #{tpu_custom_call.1} parent=31 // pred_fallthru
          _
        %s222 = sand.u32 %s43, 1
        %s223 = scalar_lea.sflag [#allocation3], %s222
        %s224 = sand.u32 %s43, 1
        %s225 = smul.addr %s224, 16
        %s226 = scalar_lea.vmem [#allocation2], %s225
        %p227 = pneg %p56
        %p228 = pneg %p53
        %p229 = pneg %p77
        %p230 = pneg %p74
        %p231 = pneg %p98
        %p232 = pneg %p95
        %p233 = pneg %p126
        %p234 = pneg %p123
        %s235 = sand.u32 %s113, 1
        %s236 = scalar_lea.sflag [#allocation4], %s235
        %s237 = sand.u32 %s113, 1
        %s238 = smul.addr %s237, 16
        %s239 = scalar_lea.vmem [#allocation8], %s238
        %s240 = smul.u32 2, %s26
        %s241 = smul.u32 2, %s26
        %v243 = vld [vmem:[%s206] sm:$0xff]
        %v244 = vld [vmem:[%s206 + $0x8] sm:$0xff]
        %vm245 = vcmask 523264
        %v246 = vsel %vm245, %v243, 0.0
        %247 = vadd.xlane.f32.xlu0 %v246
        %v248 = vpop.xlane.xlu0 %247
        %v249 = vsel %vm245, %v244, 0.0
        %250 = vadd.xlane.f32.xlu0 %v249
        %v251 = vpop.xlane.xlu0 %250
        %v252 = vrcp.pop 64.0
        %v253 = vmul.f32 64.0, %v252
        %v254 = vsub.f32 1.0, %v253
        %v255 = vmul.f32 %v252, %v254
        %v256 = vadd.f32 %v252, %v255
        %vm257 = vweird.f32 %v252
        %v258 = vsel %vm257, %v252, %v256
        %v259 = vmul.f32 %v248, %v258
        %v260 = vmul.f32 %v251, %v258
        %v261 = vsub.f32 %v243, %v259
        %v262 = vsub.f32 %v244, %v260
        %v263 = vmul.f32 %v261, %v261
        %v264 = vmul.f32 %v262, %v262
        %v265 = vsel %vm245, %v263, 0.0
        %266 = vadd.xlane.f32.xlu0 %v265
        %v267 = vpop.xlane.xlu0 %266
        %v268 = vsel %vm245, %v264, 0.0
        %269 = vadd.xlane.f32.xlu0 %v268
        %v270 = vpop.xlane.xlu0 %269
        %v271 = vmul.f32 %v267, %v258
        %v272 = vmul.f32 %v270, %v258
        %v273 = vadd.f32 %v271, 1e-06
        %v274 = vadd.f32 %v272, 1e-06
        %v275 = vrsqrt.pop %v273
        %v276 = vmul.f32 %v275, %v273
        %v277 = vmul.f32 %v276, %v275
        %v278 = vmul.f32 0.5, %v277
        %v279 = vsub.f32 1.5, %v278
        %v280 = vmul.f32 %v275, %v279
        %vm281 = vweird.f32 %v273
        %vm282 = vweird.f32 %v275
        %vm283 = vmor %vm281, %vm282
        %v284 = vsel %vm283, %v275, %v280
        %v285 = vrsqrt.pop %v274
        %v286 = vmul.f32 %v285, %v274
        %v287 = vmul.f32 %v286, %v285
        %v288 = vmul.f32 0.5, %v287
        %v289 = vsub.f32 1.5, %v288
        %v290 = vmul.f32 %v285, %v289
        %vm291 = vweird.f32 %v274
        %vm292 = vweird.f32 %v285
        %vm293 = vmor %vm291, %vm292
        %v294 = vsel %vm293, %v285, %v290
        %v295 = vmul.f32 %v261, %v284
        %v296 = vmul.f32 %v262, %v294
        %v297 = vpack.c.bf16 %v296, %v295
        %v298 = vld [vmem:[#allocation5] sm:$0xff]
        %v299 = vld [vmem:[#allocation5 + $0x8] sm:$0xff]
        %v300 = vld [vmem:[#allocation5 + $0x10] sm:$0xff]
        %v301 = vld [vmem:[#allocation5 + $0x18] sm:$0xff]
        %v302 = vld [vmem:[#allocation5 + $0x20] sm:$0xff]
        %v303 = vld [vmem:[#allocation5 + $0x28] sm:$0xff]
        %v304 = vld [vmem:[#allocation5 + $0x30] sm:$0xff]
        %v305 = vld [vmem:[#allocation5 + $0x38] sm:$0xff]
        %v306 = vld [vmem:[#allocation7] sm:$0x3]
        %v308 = vperm.slane %v306, 0
        %v309 = vperm.slane %v306, 1
        %v320 = vunpack.c.l.b16 %v298
        %v321 = vunpack.c.h.b16 %v298
        %v322 = vunpack.c.l.b16 %v299
        %v323 = vunpack.c.h.b16 %v299
        %v324 = vunpack.c.l.b16 %v300
        %v325 = vunpack.c.h.b16 %v300
        %v326 = vunpack.c.l.b16 %v301
        %v327 = vunpack.c.h.b16 %v301
        %v328 = vunpack.c.l.b16 %v302
        %v329 = vunpack.c.h.b16 %v302
        %v330 = vunpack.c.l.b16 %v303
        %v331 = vunpack.c.h.b16 %v303
        %v332 = vunpack.c.l.b16 %v304
        %v333 = vunpack.c.h.b16 %v304
        %v334 = vunpack.c.l.b16 %v305
        %v335 = vunpack.c.h.b16 %v305
        %v336 = vpack.c.b16 %v322, %v320
        %v337 = vpack.c.b16 %v323, %v321
        %v338 = vpack.c.b16 %v326, %v324
        %v339 = vpack.c.b16 %v327, %v325
        %v340 = vpack.c.b16 %v330, %v328
        %v341 = vpack.c.b16 %v331, %v329
        %v342 = vpack.c.b16 %v334, %v332
        %v343 = vpack.c.b16 %v335, %v333
        %v353 = vsel %vm245, %v297, 0
        %355 = vmatpush.bf16.msra.mxu0 0
        %356 = vmatpush.bf16.msra.mxu0 0
        %357 = vmatpush.bf16.msra.mxu0 0
        %358 = vmatpush.bf16.msra.mxu0 0
        %359 = vmatpush.bf16.msra.mxu0 %v342
        %360 = vmatpush.bf16.msra.mxu0 %v340
        %361 = vmatpush.bf16.msra.mxu0 %v338
        %362 = vmatpush.bf16.msra.mxu0 %v336
        %363 = vmatmul.bf16.gmra.mxu0 %v353
        %v364 = vpop.f32.mrf.mxu0
        %v365 = vadd.f32 %v308, %v364
        %v366 = vpop.f32.mrf.mxu0
        %v367 = vadd.f32 %v308, %v366
        %368 = vdwg.mxu0
        %369 = vmatpush.bf16.msra.mxu0 0
        %370 = vmatpush.bf16.msra.mxu0 0
        %371 = vmatpush.bf16.msra.mxu0 0
        %372 = vmatpush.bf16.msra.mxu0 0
        %373 = vmatpush.bf16.msra.mxu0 %v343
        %374 = vmatpush.bf16.msra.mxu0 %v341
        %375 = vmatpush.bf16.msra.mxu0 %v339
        %376 = vmatpush.bf16.msra.mxu0 %v337
        %377 = vmatmul.bf16.gmra.mxu0 %v353
        %v378 = vpop.f32.mrf.mxu0
        %v379 = vadd.f32 %v309, %v378
        %v380 = vpop.f32.mrf.mxu0
        %v381 = vadd.f32 %v309, %v380
        %382 = vdwg.mxu0
        %v383 = vpack.c.bf16 %v379, %v365
        %v384 = vpack.c.bf16 %v381, %v367
        %vm385 = vcmask 1043456
        %vm386 = vcmask 523268
        %vm387 = vmor %vm386, %vm385
        %388 = vst.msk [vmem:[%s239] sm:$0xff] %vm387, %v383
        %389 = vst.msk [vmem:[%s239 + $0x8] sm:$0xff] %vm387, %v384
        %s390 = sand.u32 %s113, 1
        %s391 = scalar_lea.sflag [#allocation4], %s390
        %s392 = sand.u32 %s113, 1
        %s393 = smul.addr %s392, 16
        %s394 = scalar_lea.vmem [#allocation8], %s393
        // Predicated region
        $region45: #{tpu_custom_call.1} parent=31 // pred_check
          %p395 = pneg %p123
        $region46: #{tpu_custom_call.1} parent=31 // pred_check_branch
          %397 = sbr.rel (%p395) target = $region48
        $region47: #{tpu_custom_call.1} parent=31 // pred_region
          %s398 = smul.u32 2, %s26
          %400 = vsyncadd %s391, 0
          %s401 = smul.addr %s398, 2
          %s402 = smul.addr %s25, 16
          %s403 = sadd.s32 %s401, %s402
          %s404 = smul.addr %s403, 4
          %s405 = scalar_lea.hbm %s3, %s404
          %s406 = sshll.u32 %s394, 4
          %s407 = int_to_ptr.vmem [resolvable:$true] %s406
          %s408 = sshll.u32 %s405, 4
          %s409 = int_to_ptr.hbm [resolvable:$true] %s408
          %414 = dma.vmem_to_hbm [thread:$0]  %s407, 256, %s409, %s391, 128, 128, 8
        $region48: #{tpu_custom_call.1} parent=31 // pred_fallthru
          _
      $region32: #{tpu_custom_call.1} parent=5 // pred_fallthru
        _
      %p415 = scmp.le.s32.totalorder 2, %s16
      // Predicated region
      $region49: #{tpu_custom_call.1} parent=5 // pred_check
        %p416 = pneg %p415
      $region50: #{tpu_custom_call.1} parent=5 // pred_check_branch
        %418 = sbr.rel (%p416) target = $region52
      $region51: #{tpu_custom_call.1} parent=5 // pred_region
        %s419 = ssub.s32 %s16, 2
        // Predicated region
        $region53: #{tpu_custom_call.1} parent=51 // pred_check
          %p420 = pneg %p129
        $region54: #{tpu_custom_call.1} parent=51 // pred_check_branch
          %422 = sbr.rel (%p420) target = $region56
        $region55: #{tpu_custom_call.1} parent=51 // pred_region
          %s423 = sand.u32 %s114, 1
          %s424 = scalar_lea.sflag [#allocation4], %s423
          %s425 = sand.u32 %s114, 1
          %s426 = smul.addr %s425, 16
          %s427 = scalar_lea.vmem [#allocation8], %s426
          %429 = dma.done %s424, 256
        $region56: #{tpu_custom_call.1} parent=51 // pred_fallthru
          _
      $region52: #{tpu_custom_call.1} parent=5 // pred_fallthru
        _
    $region6: #{tpu_custom_call.1} parent=1 // loop_footer
      %s20 = sadd.s32 1, %s16
    $region7: #{tpu_custom_call.1} parent=1 // loop_footer_branch
      %15 = sbr.rel target = $region3
    $region8: #{tpu_custom_call.1} parent=1 // loop_exit
      _
    %430 = vsyncpa [#allocation3], 1
    %s431 = scalar_lea.sflag [#allocation3], 1
    %432 = vsyncpa %s431, 1
    %433 = vsyncpa [#allocation6], 1
    %434 = vsyncpa [#allocation4], 1
    %s435 = scalar_lea.sflag [#allocation4], 1
    %436 = vsyncpa %s435, 1

</llo_original>
